<compile_context>
chip_gen: v7x
topology: tpu7x:2x2x1
jax: 0.10.0
libtpu: 0.0.40
codegen_flags: <defaults>
</compile_context>

<pallas_src>
import functools

import jax
import jax.numpy as jnp
from jax.experimental import pallas as pl
from jax.experimental.pallas import tpu as pltpu

_LANES = 128
_TARGET_TILE_BYTES = 2 * 1024 * 1024  # ~2 MiB per input tile (per pipeline buffer)


def _smooth_l1_sum_kernel(pred_ref, label_ref, acc_ref, *, n_elem, tile_rows,
                          blocks_per_slice):
    """Accumulate smooth-L1(pred - label) into a per-slice (tile_rows, 128) f32 block.

    acc_ref is the OUTPUT block; its block index depends only on the parallel slice
    axis, so it stays resident in VMEM across the inner (reduction) grid axis.
    """
    i = pl.program_id(1)

    @pl.when(i == 0)
    def _init():
        acc_ref[...] = jnp.zeros_like(acc_ref)

    # Cast per-tile: inputs are DMA'd in their native dtype (bf16 stays bf16 in HBM).
    d = pred_ref[...].astype(jnp.float32) - label_ref[...].astype(jnp.float32)
    ad = jnp.abs(d)
    elem = jnp.where(ad < 1.0, 0.5 * d * d, ad - 0.5)

    # Mask everything past the true element count: lane padding, the undefined tail
    # of a partial last tile, and phantom (index-clamped) tiles on the slice axis.
    blk = pl.program_id(0) * blocks_per_slice + i          # logical (unclamped) tile
    row_idx = jax.lax.broadcasted_iota(jnp.int32, (tile_rows, _LANES), 0)
    lane_idx = jax.lax.broadcasted_iota(jnp.int32, (tile_rows, _LANES), 1)
    flat = (blk * tile_rows + row_idx) * _LANES + lane_idx
    elem = jnp.where(flat < n_elem, elem, 0.0)

    # Pure VPU vector accumulate (no per-step XLU reduce / SMEM scalar RMW).
    acc_ref[...] += elem


def smooth_l1_loss_pallas(pred, label, loss_weight=1.0):
    """loss_weight * mean(smooth_l1(pred - label)), beta=1.0 (PyTorch default)."""
    assert pred.shape == label.shape, "pred/label must have identical shapes"
    n_elem = pred.size
    assert 0 < n_elem < 2**31, "int32 flat-index masking supports < 2**31 elements"

    pred_f = pred.reshape(-1)     # free reshape of a contiguous array
    label_f = label.reshape(-1)

    # Only pad up to a lane multiple (rare, tiny); values are irrelevant because the
    # kernel masks by the true element count.
    rem = n_elem % _LANES
    if rem:
        pad = _LANES - rem
        pred_f = jnp.pad(pred_f, (0, pad))
        label_f = jnp.pad(label_f, (0, pad))
    rows = pred_f.size // _LANES

    pred2d = pred_f.reshape(rows, _LANES)
    label2d = label_f.reshape(rows, _LANES)

    # ~2 MiB per input tile, row count a multiple of 16 (bf16 sublane packing).
    itemsize = jnp.dtype(pred.dtype).itemsize
    max_tile_rows = max(16, (_TARGET_TILE_BYTES // (_LANES * itemsize)) // 16 * 16)
    tile_rows = rows if rows <= max_tile_rows else max_tile_rows

    num_blocks = -(-rows // tile_rows)
    # Megacore: split tiles into 2 "parallel" slices (v7x has 2 TCs); each slice
    # owns its own accumulator output block. Harmless (sequential) on v5e/v6e.
    num_slices = 2 if num_blocks >= 2 else 1
    blocks_per_slice = -(-num_blocks // num_slices)

    def in_index_map(s, i):
        blk = s * blocks_per_slice + i
        # Clamp phantom tiles (odd block counts) to a valid block; the kernel's
        # flat-index mask zeroes their contribution.
        return (jnp.minimum(blk, num_blocks - 1), 0)

    kernel = functools.partial(
        _smooth_l1_sum_kernel,
        n_elem=n_elem,
        tile_rows=tile_rows,
        blocks_per_slice=blocks_per_slice,
    )

    partial_sums = pl.pallas_call(
        kernel,
        out_shape=jax.ShapeDtypeStruct((num_slices * tile_rows, _LANES), jnp.float32),
        grid=(num_slices, blocks_per_slice),
        in_specs=[
            pl.BlockSpec((tile_rows, _LANES), in_index_map),
            pl.BlockSpec((tile_rows, _LANES), in_index_map),
        ],
        out_specs=pl.BlockSpec((tile_rows, _LANES), lambda s, i: (s, 0)),
        compiler_params=pltpu.CompilerParams(
            dimension_semantics=("parallel", "arbitrary"),
            vmem_limit_bytes=32 * 1024 * 1024,
        ),
    )(pred2d, label2d)

    # Tiny final reduction over the per-lane partial sums, then mean + loss_weight.
    total = jnp.sum(partial_sums, dtype=jnp.float32)
    mean_loss = total / jnp.float32(n_elem)
    return jnp.float32(loss_weight) * mean_loss


if __name__ == "__main__":
    key = jax.random.PRNGKey(0)

    def ref_loss(p, t, w=1.0):
        d = p.astype(jnp.float32) - t.astype(jnp.float32)
        ad = jnp.abs(d)
        return jnp.float32(w) * jnp.mean(jnp.where(ad < 1.0, 0.5 * d * d, ad - 0.5))

    # Primary small NCHW example (batch=2, channels=4, spatial=16x16).
    k1, k2 = jax.random.split(key)
    pred = jax.random.normal(k1, (2, 4, 16, 16), dtype=jnp.float32)
    label = jax.random.normal(k2, (2, 4, 16, 16), dtype=jnp.float32)
    loss = jax.block_until_ready(smooth_l1_loss_pallas(pred, label, loss_weight=1.0))
    assert jnp.allclose(loss, ref_loss(pred, label, 1.0), rtol=1e-5, atol=1e-6), loss

    # Size not a multiple of 128 -> exercises lane pad + in-kernel masking.
    k3, k4, k5, k6 = jax.random.split(key, 4)
    p2 = jax.random.normal(k3, (2, 3, 17, 19), dtype=jnp.float32)
    l2 = jax.random.normal(k4, (2, 3, 17, 19), dtype=jnp.float32)
    out2 = jax.block_until_ready(smooth_l1_loss_pallas(p2, l2, loss_weight=0.5))
    assert jnp.allclose(out2, ref_loss(p2, l2, 0.5), rtol=1e-5, atol=1e-6), out2

    # bf16 inputs, multiple tiles, two parallel slices, partial last tile.
    p3 = jax.random.normal(k5, (2, 4, 512, 320), dtype=jnp.bfloat16)
    l3 = jax.random.normal(k6, (2, 4, 512, 320), dtype=jnp.bfloat16)
    out3 = jax.block_until_ready(smooth_l1_loss_pallas(p3, l3, loss_weight=1.0))
    assert jnp.allclose(out3, ref_loss(p3, l3, 1.0), rtol=1e-4, atol=1e-5), out3

    print("KERNEL_OK")
</pallas_src>

<mosaic_0001>
module attributes {stable_mosaic.version = 11 : i64} {
  func.func @_smooth_l1_sum_kernel(%arg0: i32, %arg1: i32, %arg2: memref<16x128xf32, #tpu.memory_space<vmem>>, %arg3: memref<16x128xf32, #tpu.memory_space<vmem>>, %arg4: memref<16x128xf32, #tpu.memory_space<vmem>>) attributes {dimension_semantics = [#tpu.dimension_semantics<parallel>, #tpu.dimension_semantics<arbitrary>], iteration_bounds = array<i64: 1, 1>, scalar_prefetch = 0 : i64, scratch_operands = 0 : i64, tpu.core_type = #tpu.core_type<tc>, window_params = [{transform_indices = @transform_0, window_bounds = array<i64: 16, 128>}, {transform_indices = @transform_1, window_bounds = array<i64: 16, 128>}, {transform_indices = @transform_2, window_bounds = array<i64: 16, 128>}]} {
    %c0_i32 = arith.constant 0 : i32
    %0 = arith.cmpi eq, %arg1, %c0_i32 : i32
    %1 = arith.extui %0 : i1 to i32
    %c0_i32_0 = arith.constant 0 : i32
    %2 = arith.cmpi ne, %1, %c0_i32_0 : i32
    scf.if %2 {
      %cst_11 = arith.constant 0.000000e+00 : f32
      %32 = vector.broadcast %cst_11 : f32 to vector<16x128xf32>
      %c0_12 = arith.constant 0 : index
      %c0_13 = arith.constant 0 : index
      %33 = vector.load %arg4[%c0_12, %c0_13] : memref<16x128xf32, #tpu.memory_space<vmem>>, vector<16x128xf32>
      tpu.vector_store %arg4[%c0_12, %c0_13], %32 {strides = array<i32>} : memref<16x128xf32, #tpu.memory_space<vmem>>, vector<16x128xf32>,
    } else {
    }
    %c0 = arith.constant 0 : index
    %c0_1 = arith.constant 0 : index
    %3 = vector.load %arg2[%c0, %c0_1] : memref<16x128xf32, #tpu.memory_space<vmem>>, vector<16x128xf32>
    %c0_2 = arith.constant 0 : index
    %c0_3 = arith.constant 0 : index
    %4 = vector.load %arg3[%c0_2, %c0_3] : memref<16x128xf32, #tpu.memory_space<vmem>>, vector<16x128xf32>
    %5 = arith.subf %3, %4 : vector<16x128xf32>
    %6 = math.absf %5 : vector<16x128xf32>
    %cst = arith.constant 1.000000e+00 : f32
    %7 = vector.broadcast %cst : f32 to vector<16x128xf32>
    %8 = arith.cmpf olt, %6, %7 : vector<16x128xf32>
    %cst_4 = arith.constant 5.000000e-01 : f32
    %9 = vector.broadcast %cst_4 : f32 to vector<16x128xf32>
    %10 = arith.mulf %9, %5 : vector<16x128xf32>
    %11 = arith.mulf %10, %5 : vector<16x128xf32>
    %cst_5 = arith.constant 5.000000e-01 : f32
    %12 = vector.broadcast %cst_5 : f32 to vector<16x128xf32>
    %13 = arith.subf %6, %12 : vector<16x128xf32>
    %14 = arith.select %8, %11, %13 : vector<16x128xi1>, vector<16x128xf32>
    %c1_i32 = arith.constant 1 : i32
    %15 = arith.muli %arg0, %c1_i32 : i32
    %16 = arith.addi %15, %arg1 : i32
    %17 = tpu.iota {dimensions = array<i32: 0>} : vector<16x128xi32>
    %18 = tpu.iota {dimensions = array<i32: 1>} : vector<16x128xi32>
    %c16_i32 = arith.constant 16 : i32
    %19 = arith.muli %16, %c16_i32 : i32
    %20 = vector.broadcast %19 : i32 to vector<16x128xi32>
    %21 = arith.addi %20, %17 : vector<16x128xi32>
    %c128_i32 = arith.constant 128 : i32
    %22 = vector.broadcast %c128_i32 : i32 to vector<16x128xi32>
    %23 = arith.muli %21, %22 : vector<16x128xi32>
    %24 = arith.addi %23, %18 : vector<16x128xi32>
    %c2048_i32 = arith.constant 2048 : i32
    %25 = vector.broadcast %c2048_i32 : i32 to vector<16x128xi32>
    %26 = arith.cmpi slt, %24, %25 : vector<16x128xi32>
    %cst_6 = arith.constant 0.000000e+00 : f32
    %27 = vector.broadcast %cst_6 : f32 to vector<16x128xf32>
    %28 = arith.select %26, %14, %27 : vector<16x128xi1>, vector<16x128xf32>
    %c0_7 = arith.constant 0 : index
    %c0_8 = arith.constant 0 : index
    %29 = vector.load %arg4[%c0_7, %c0_8] : memref<16x128xf32, #tpu.memory_space<vmem>>, vector<16x128xf32>
    %30 = arith.addf %29, %28 : vector<16x128xf32>
    %c0_9 = arith.constant 0 : index
    %c0_10 = arith.constant 0 : index
    %31 = vector.load %arg4[%c0_9, %c0_10] : memref<16x128xf32, #tpu.memory_space<vmem>>, vector<16x128xf32>
    tpu.vector_store %arg4[%c0_9, %c0_10], %30 {strides = array<i32>} : memref<16x128xf32, #tpu.memory_space<vmem>>, vector<16x128xf32>,
    return
  }
  func.func @transform_0(%arg0: i32, %arg1: i32) -> (i32, i32) {
    %c1_i32 = arith.constant 1 : i32
    %0 = arith.muli %arg0, %c1_i32 : i32
    %1 = arith.addi %0, %arg1 : i32
    %c0_i32 = arith.constant 0 : i32
    %2 = arith.minsi %1, %c0_i32 : i32
    %c0_i32_0 = arith.constant 0 : i32
    %c0_i32_1 = arith.constant 0 : i32
    return %2, %c0_i32_0 : i32, i32
  }
  func.func @transform_1(%arg0: i32, %arg1: i32) -> (i32, i32) {
    %c1_i32 = arith.constant 1 : i32
    %0 = arith.muli %arg0, %c1_i32 : i32
    %1 = arith.addi %0, %arg1 : i32
    %c0_i32 = arith.constant 0 : i32
    %2 = arith.minsi %1, %c0_i32 : i32
    %c0_i32_0 = arith.constant 0 : i32
    %c0_i32_1 = arith.constant 0 : i32
    return %2, %c0_i32_0 : i32, i32
  }
  func.func @transform_2(%arg0: i32, %arg1: i32) -> (i32, i32) {
    %c0_i32 = arith.constant 0 : i32
    %c0_i32_0 = arith.constant 0 : i32
    return %arg0, %c0_i32 : i32, i32
  }
}

</mosaic_0001>

<llo_original>
// kernel: tpu_custom_call.1
$region0: #{tpu_custom_call.1}
  #allocation0 [shape = 'u32[]', space=smem, size = 0x4, offset = 0x4, fixed_abs, tag = 'smem constant byte address 0x4 - core index']
  #allocation1 [shape = 'u32[144,128]{1,0:T(1,128)}', space=vmem, size = 0x12000, scoped, tag = 'internal scratch']
  %s0 = inlined_call_operand.hbm [shape: f32[16,128], index: 0, kind: input, shape index: {}]
  %s1 = inlined_call_operand.hbm [shape: f32[16,128], index: 1, kind: input, shape index: {}]
  %s2 = inlined_call_operand.hbm [shape: f32[16,128], index: 2, kind: output, shape index: {}]
  %s3 = sld [smem:[#allocation0]]
  $region30: #{tpu_custom_call.1} parent=0
    _
  %s5 = ssub.s32 1, %s3
  %s6 = scalar_select 0, %s5, %s3
  $region1: #{tpu_custom_call.1} parent=0
    #allocation2 [shape = 'u8[8192]{0}', space=vmem, size = 0x2000, scoped, tag = 'input window, operand 0, single buffered']
    #allocation3 [shape = 's32[1]{0}', space=sflag, size = 0x4, scoped, tag = 'scoped memory for tpu_custom_call.1']
    #allocation4 [shape = 's32[1]{0}', space=sflag, size = 0x4, scoped, tag = 'scoped memory for tpu_custom_call.1']
    #allocation5 [shape = 'u8[8192]{0}', space=vmem, size = 0x2000, scoped, tag = 'input window, operand 1, single buffered']
    #allocation6 [shape = 's32[1]{0}', space=sflag, size = 0x4, scoped, tag = 'scoped memory for tpu_custom_call.1']
    #allocation7 [shape = 'u8[8192]{0}', space=vmem, size = 0x2000, scoped, tag = 'output window, operand 0, single buffered']
    %7 = vsyncpa [#allocation3], 0
    %8 = vsyncpa [#allocation6], 0
    %9 = vsyncpa [#allocation4], 0
    // Predicated region
    $region2: #{tpu_custom_call.1} parent=1 // pred_check
      _
    $region3: #{tpu_custom_call.1} parent=1 // pred_check_branch
      %11 = sbr.rel (0) target = $region5
    $region4: #{tpu_custom_call.1} parent=1 // pred_region
      %s12 = sadd.s32 0, 0
      %p13 = scmp.lt.s32.totalorder %s12, 0
      %s14 = scalar_select %p13, %s12, 0
      %s15 = smul.u32 2, %s14
      %s17 = ssub.s32 256, 256
      %18 = vsyncadd [#allocation3], %s17
      %s19 = smul.addr %s15, 128
      %s20 = scalar_lea.hbm %s0, %s19
      %s21 = sshll.u32 [#allocation2], 4
      %s22 = int_to_ptr.vmem [resolvable:$true] %s21
      %27 = dma.hbm_to_vmem [thread:$0]  %s20, 256, %s22, [#allocation3], 128, 128, 8
    $region5: #{tpu_custom_call.1} parent=1 // pred_fallthru
      _
    // Predicated region
    $region6: #{tpu_custom_call.1} parent=1 // pred_check
      _
    $region7: #{tpu_custom_call.1} parent=1 // pred_check_branch
      %29 = sbr.rel (0) target = $region9
    $region8: #{tpu_custom_call.1} parent=1 // pred_region
      %s30 = sadd.s32 0, 0
      %p31 = scmp.lt.s32.totalorder %s30, 0
      %s32 = scalar_select %p31, %s30, 0
      %s33 = smul.u32 2, %s32
      %s35 = ssub.s32 256, 256
      %36 = vsyncadd [#allocation6], %s35
      %s37 = smul.addr %s33, 128
      %s38 = scalar_lea.hbm %s1, %s37
      %s39 = sshll.u32 [#allocation5], 4
      %s40 = int_to_ptr.vmem [resolvable:$true] %s39
      %45 = dma.hbm_to_vmem [thread:$0]  %s38, 256, %s40, [#allocation6], 128, 128, 8
    $region9: #{tpu_custom_call.1} parent=1 // pred_fallthru
      _
    // Predicated region
    $region10: #{tpu_custom_call.1} parent=1 // pred_check
      _
    $region11: #{tpu_custom_call.1} parent=1 // pred_check_branch
      %47 = sbr.rel (0) target = $region13
    $region12: #{tpu_custom_call.1} parent=1 // pred_region
      %48 = dma.done [#allocation3], 256
    $region13: #{tpu_custom_call.1} parent=1 // pred_fallthru
      _
    // Predicated region
    $region14: #{tpu_custom_call.1} parent=1 // pred_check
      _
    $region15: #{tpu_custom_call.1} parent=1 // pred_check_branch
      %50 = sbr.rel (0) target = $region17
    $region16: #{tpu_custom_call.1} parent=1 // pred_region
      %51 = dma.done [#allocation6], 256
    $region17: #{tpu_custom_call.1} parent=1 // pred_fallthru
      _
    %s52 = sadd.s32 0, 0
    %p53 = scmp.lt.s32.totalorder %s52, 0
    %s54 = scalar_select %p53, %s52, 0
    %s55 = smul.u32 2, %s54
    %s56 = sadd.s32 0, 0
    %p57 = scmp.lt.s32.totalorder %s56, 0
    %s58 = scalar_select %p57, %s56, 0
    %s59 = smul.u32 2, %s58
    %p60 = scmp.eq.s32.totalorder 0, 0
    // Predicated region
    $region18: #{tpu_custom_call.1} parent=1 // pred_check
      %p61 = pneg %p60
    $region19: #{tpu_custom_call.1} parent=1 // pred_check_branch
      %63 = sbr.rel (%p61) target = $region21
    $region20: #{tpu_custom_call.1} parent=1 // pred_region
      %64 = vst [vmem:[#allocation7] sm:$0xff] 0.0
      %65 = vst [vmem:[#allocation7 + $0x8] sm:$0xff] 0.0
    $region21: #{tpu_custom_call.1} parent=1 // pred_fallthru
      _
    %v66 = vld [vmem:[#allocation2] sm:$0xff]
    %v67 = vld [vmem:[#allocation2 + $0x8] sm:$0xff]
    %v68 = vld [vmem:[#allocation5] sm:$0xff]
    %v69 = vld [vmem:[#allocation5 + $0x8] sm:$0xff]
    %v70 = vsub.f32 %v66, %v68
    %v71 = vsub.f32 %v67, %v69
    %v72 = vand.u32 2147483647, %v70
    %v73 = vand.u32 2147483647, %v71
    %vm74 = vcmp.lt.f32.partialorder %v72, 1.0
    %vm75 = vcmp.lt.f32.partialorder %v73, 1.0
    %v76 = vmul.f32 %v70, 0.5
    %v77 = vmul.f32 %v71, 0.5
    %v78 = vmul.f32 %v76, %v70
    %v79 = vmul.f32 %v77, %v71
    %v80 = vsub.f32 %v72, 0.5
    %v81 = vsub.f32 %v73, 0.5
    %v82 = vsel %vm74, %v78, %v80
    %v83 = vsel %vm75, %v79, %v81
    %s84 = sadd.s32 0, 0
    %v85 = vlaneseq
    %v86 = vshrl.u32 %v85, 7
    %v87 = vadd.s32 %v86, 8
    %v88 = vlaneseq
    %v89 = vand.u32 %v88, 127
    %s90 = smul.u32 %s84, 16
    %v91 = vstv %s90
    %v92 = vadd.s32 %v91, %v86
    %v93 = vadd.s32 %v91, %v87
    %v94 = vmul.u32 %v92, 128
    %v95 = vmul.u32 %v93, 128
    %v96 = vadd.s32 %v94, %v89
    %v97 = vadd.s32 %v95, %v89
    %vm98 = vcmp.lt.s32.totalorder %v96, 2048
    %vm99 = vcmp.lt.s32.totalorder %v97, 2048
    %v100 = vsel %vm98, %v82, 0.0
    %v101 = vsel %vm99, %v83, 0.0
    %v102 = vld [vmem:[#allocation7] sm:$0xff]
    %v103 = vld [vmem:[#allocation7 + $0x8] sm:$0xff]
    %v104 = vadd.f32 %v102, %v100
    %v105 = vadd.f32 %v103, %v101
    %106 = vst [vmem:[#allocation7] sm:$0xff] %v104
    %107 = vst [vmem:[#allocation7 + $0x8] sm:$0xff] %v105
    // Predicated region
    $region22: #{tpu_custom_call.1} parent=1 // pred_check
      _
    $region23: #{tpu_custom_call.1} parent=1 // pred_check_branch
      %109 = sbr.rel (0) target = $region25
    $region24: #{tpu_custom_call.1} parent=1 // pred_region
      %s111 = ssub.s32 256, 256
      %112 = vsyncadd [#allocation4], %s111
      %s113 = sshll.u32 [#allocation7], 4
      %s114 = int_to_ptr.vmem [resolvable:$true] %s113
      %119 = dma.vmem_to_hbm [thread:$0]  %s114, 256, %s2, [#allocation4], 128, 128, 8
    $region25: #{tpu_custom_call.1} parent=1 // pred_fallthru
      _
    // Predicated region
    $region26: #{tpu_custom_call.1} parent=1 // pred_check
      _
    $region27: #{tpu_custom_call.1} parent=1 // pred_check_branch
      %121 = sbr.rel (0) target = $region29
    $region28: #{tpu_custom_call.1} parent=1 // pred_region
      %122 = dma.done [#allocation4], 256
    $region29: #{tpu_custom_call.1} parent=1 // pred_fallthru
      _
    %123 = vsyncpa [#allocation3], 1
    %124 = vsyncpa [#allocation6], 1
    %125 = vsyncpa [#allocation4], 1

</llo_original>
